<compile_context>
chip_gen: v5e
topology: v5e:2x2
jax: 0.10.0
libtpu: 0.0.40
codegen_flags: <defaults>
</compile_context>

<pallas_src>
import functools
import math

import jax
import jax.numpy as jnp
from jax.experimental import pallas as pl
from jax.experimental.pallas import tpu as pltpu

_BN_EPS = 1e-5


# ----------------------------- fused block kernel ---------------------------

def _se_basic_block_kernel(*refs, L, Lout, cin, cout, stride, has_down):
    """One CifarSEBasicBlock forward for a (bt, L, cin) batch tile.

    refs = [x, w1, b1, w2, b2, se_w1, se_w2, (wd, bd)?, (sel)?, out,
            cols1_scratch, cols2_scratch]
    """
    it = iter(refs)
    x_ref = next(it)
    w1_ref = next(it); b1_ref = next(it)
    w2_ref = next(it); b2_ref = next(it)
    sw1_ref = next(it); sw2_ref = next(it)
    wd_ref = next(it) if has_down else None
    bd_ref = next(it) if has_down else None
    sel_ref = next(it) if stride > 1 else None
    o_ref = next(it)
    cols1_ref = next(it); cols2_ref = next(it)

    f32, bf16 = jnp.float32, jnp.bfloat16
    bt = x_ref.shape[0]
    x = x_ref[...]                                        # (bt, L, cin) f32

    # ---- conv1: stride-1 im2col (k=3, pad=1) built in VMEM scratch ----------
    z1 = jnp.zeros((bt, 1, cin), f32)
    cols1_ref[:, 0:1, 0:cin] = z1                         # left tap, padded row
    cols1_ref[:, 1:, 0:cin] = x[:, :L - 1, :]
    cols1_ref[:, :, cin:2 * cin] = x                      # centre tap
    cols1_ref[:, :L - 1, 2 * cin:3 * cin] = x[:, 1:, :]   # right tap
    cols1_ref[:, L - 1:L, 2 * cin:3 * cin] = z1           # right tap, padded row

    cols1 = cols1_ref[...].astype(bf16).reshape(bt * L, 3 * cin)
    if stride > 1:
        sel = sel_ref[...]                                # (bt*Lout, bt*L) 0/1 bf16
        cols1 = jnp.dot(sel, cols1, preferred_element_type=f32).astype(bf16)

    # conv1 + folded BN1 + ReLU (single K = 3*cin MXU matmul, f32 accumulate)
    h1 = jnp.dot(cols1, w1_ref[...], preferred_element_type=f32)
    h1 = jnp.maximum(h1 + b1_ref[...], 0.0)
    h1 = h1.reshape(bt, Lout, cout)                       # f32

    # ---- conv2: im2col (stride 1) in VMEM scratch ---------------------------
    z2 = jnp.zeros((bt, 1, cout), f32)
    cols2_ref[:, 0:1, 0:cout] = z2
    cols2_ref[:, 1:, 0:cout] = h1[:, :Lout - 1, :]
    cols2_ref[:, :, cout:2 * cout] = h1
    cols2_ref[:, :Lout - 1, 2 * cout:3 * cout] = h1[:, 1:, :]
    cols2_ref[:, Lout - 1:Lout, 2 * cout:3 * cout] = z2

    cols2 = cols2_ref[...].astype(bf16).reshape(bt * Lout, 3 * cout)
    h2 = jnp.dot(cols2, w2_ref[...], preferred_element_type=f32) + b2_ref[...]
    h2 = h2.reshape(bt, Lout, cout)                       # conv2 + BN2 (no ReLU yet)

    # ---- Squeeze-Excite: avg-pool -> fc -> ReLU -> fc -> sigmoid -> scale ----
    pooled = jnp.mean(h2, axis=1)                         # (bt, cout) f32
    se_h = jnp.maximum(
        jnp.dot(pooled.astype(bf16), sw1_ref[...], preferred_element_type=f32), 0.0)
    gate = jax.nn.sigmoid(
        jnp.dot(se_h.astype(bf16), sw2_ref[...], preferred_element_type=f32))
    h2 = h2 * gate[:, None, :]

    # ---- residual (identity or fused 1x1-conv downsample) + final ReLU ------
    if has_down:
        x2d = x.astype(bf16).reshape(bt * L, cin)
        if stride > 1:
            x2d = jnp.dot(sel, x2d, preferred_element_type=f32).astype(bf16)
        res = jnp.dot(x2d, wd_ref[...], preferred_element_type=f32) + bd_ref[...]
        res = res.reshape(bt, Lout, cout)
    else:
        res = x                                           # identity shortcut (f32)

    o_ref[...] = jnp.maximum(h2 + res, 0.0)


# ----------------------------- wrapper ---------------------------------------

def _stride_selection(bt, L, Lout, stride, dtype):
    """0/1 block-diagonal matrix selecting row b*L + j*stride (j < Lout) per sample."""
    rows = jnp.arange(bt * Lout)
    target = (rows // Lout) * L + (rows % Lout) * stride
    return (jnp.arange(bt * L)[None, :] == target[:, None]).astype(dtype)


def se_basic_block(x_ncl, params, *, batch_tile=2, interpret=False):
    """CifarSEBasicBlock forward.  x_ncl: (N, Cin, L) as for nn.Conv1d.

    batch_tile is the per-grid-step batch slice; 2 keeps double-buffered tiles
    well inside scoped VMEM on every TPU generation (incl. v7x's 64 MiB) for
    CIFAR-like lengths/channels — raise it for larger batches.
    """
    N, cin, L = x_ncl.shape
    stride = params["stride"]
    cout = params["w1"].shape[1]
    has_down = "wd" in params
    Lout = (L - 1) // stride + 1
    if not has_down:
        # Same constraint as the PyTorch module: identity shortcut only matches
        # shapes when inplanes == planes and stride == 1.
        assert cin == cout and stride == 1, "identity shortcut needs matching shapes"

    x_nlc = jnp.transpose(x_ncl, (0, 2, 1)).astype(jnp.float32)   # (N, L, Cin)

    bt = max(1, min(batch_tile, N))
    while N % bt:
        bt -= 1

    def _whole(a):
        nd = a.ndim
        return pl.BlockSpec(a.shape, lambda i: (0,) * nd)

    inputs = [x_nlc, params["w1"], params["b1"], params["w2"], params["b2"],
              params["se_w1"], params["se_w2"]]
    in_specs = [pl.BlockSpec((bt, L, cin), lambda i: (i, 0, 0))]
    in_specs += [_whole(a) for a in inputs[1:]]
    if has_down:
        inputs += [params["wd"], params["bd"]]
        in_specs += [_whole(params["wd"]), _whole(params["bd"])]
    if stride > 1:
        sel = _stride_selection(bt, L, Lout, stride, jnp.bfloat16)
        inputs.append(sel)
        in_specs.append(_whole(sel))

    kernel = functools.partial(_se_basic_block_kernel, L=L, Lout=Lout,
                               cin=cin, cout=cout, stride=stride,
                               has_down=has_down)
    out_nlc = pl.pallas_call(
        kernel,
        grid=(N // bt,),
        in_specs=in_specs,
        out_specs=pl.BlockSpec((bt, Lout, cout), lambda i: (i, 0, 0)),
        out_shape=jax.ShapeDtypeStruct((N, Lout, cout), jnp.float32),
        scratch_shapes=[pltpu.VMEM((bt, L, 3 * cin), jnp.float32),
                        pltpu.VMEM((bt, Lout, 3 * cout), jnp.float32)],
        compiler_params=pltpu.CompilerParams(
            dimension_semantics=("parallel",),
            vmem_limit_bytes=32 * 1024 * 1024),
        interpret=interpret,
    )(*inputs)
    return jnp.transpose(out_nlc, (0, 2, 1))              # back to (N, Cout, Lout)


# ----------------------------- parameters ------------------------------------

def _fold_bn(w, gamma, beta, mean, var):
    """Fold inference-mode per-channel BN into a conv weight whose last dim is Cout."""
    scale = gamma / jnp.sqrt(var + _BN_EPS)
    return w * scale, (beta - mean * scale)[None, :]


def make_block_params(key, inplanes, planes, stride=1, reduction=16):
    k1, k2, k3, k4, k5 = jax.random.split(key, 5)
    f32, bf16 = jnp.float32, jnp.bfloat16
    r = planes // reduction
    assert r >= 1

    def kaiming(k, shape, fan_in):
        return jax.random.normal(k, shape, f32) * math.sqrt(2.0 / fan_in)

    # BatchNorm at its initial state: gamma=1, beta=0, running stats (0, 1).
    gamma = jnp.ones((planes,), f32)
    beta = jnp.zeros((planes,), f32)
    mean = jnp.zeros((planes,), f32)
    var = jnp.ones((planes,), f32)

    # Conv weights stored as (3*Cin, Cout), tap-major rows:
    #   w_mat[k * Cin + ci, co] == torch_conv.weight[co, ci, k]
    w1, b1 = _fold_bn(kaiming(k1, (3 * inplanes, planes), 3 * inplanes),
                      gamma, beta, mean, var)
    w2, b2 = _fold_bn(kaiming(k2, (3 * planes, planes), 3 * planes),
                      gamma, beta, mean, var)

    params = {
        "stride": stride,
        "w1": w1.astype(bf16), "b1": b1,
        "w2": w2.astype(bf16), "b2": b2,
        "se_w1": (jax.random.normal(k3, (planes, r), f32)
                  / math.sqrt(planes)).astype(bf16),
        "se_w2": (jax.random.normal(k4, (r, planes), f32)
                  / math.sqrt(r)).astype(bf16),
    }
    if inplanes != planes:           # same condition as the PyTorch module
        wd, bd = _fold_bn(kaiming(k5, (inplanes, planes), inplanes),
                          gamma, beta, mean, var)
        params["wd"] = wd.astype(bf16)
        params["bd"] = bd
    return params


# ----------------------------- pure-JAX reference ----------------------------

def _conv3_ref(x_nlc, w_mat, bias, stride):
    N, L, cin = x_nlc.shape
    cout = w_mat.shape[1]
    Lout = (L - 1) // stride + 1
    w = w_mat.reshape(3, cin, cout)
    xp = jnp.pad(x_nlc, ((0, 0), (1, 1), (0, 0)))
    y = jnp.zeros((N, Lout, cout), jnp.float32)
    for k in range(3):
        tap = xp[:, k:k + (Lout - 1) * stride + 1:stride, :]
        y = y + jnp.einsum("nlc,cd->nld", tap, w[k])
    return y + bias


def _reference_block(x_ncl, p):
    """f32 reference using the same bf16-rounded weights (for correctness check)."""
    f32 = jnp.float32
    stride = p["stride"]
    x = jnp.transpose(x_ncl, (0, 2, 1)).astype(f32)
    h1 = jax.nn.relu(_conv3_ref(x, p["w1"].astype(f32), p["b1"], stride))
    h2 = _conv3_ref(h1, p["w2"].astype(f32), p["b2"], 1)
    gate = jax.nn.sigmoid(
        jax.nn.relu(h2.mean(axis=1) @ p["se_w1"].astype(f32)) @ p["se_w2"].astype(f32))
    h2 = h2 * gate[:, None, :]
    if "wd" in p:
        res = x[:, ::stride, :] @ p["wd"].astype(f32) + p["bd"]
    else:
        res = x
    return jnp.transpose(jax.nn.relu(h2 + res), (0, 2, 1))


# ----------------------------- demo / self-check ------------------------------

if __name__ == "__main__":
    key = jax.random.PRNGKey(0)
    kp1, kp2, kx = jax.random.split(key, 3)

    # Small CIFAR-SE-ResNet-1D-like shapes: batch=4, channels 32 -> 64, length 32.
    N, cin, L = 4, 32, 32
    x = jax.random.normal(kx, (N, cin, L), jnp.float32)        # (N, C, L), as nn.Conv1d

    # Block with channel change + stride 2 (exercises the fused 1x1 downsample).
    p_down = make_block_params(kp1, inplanes=cin, planes=64, stride=2, reduction=16)
    y1 = se_basic_block(x, p_down, batch_tile=2)               # (4, 64, 16)

    # Block with identity shortcut (inplanes == planes, stride 1).
    p_id = make_block_params(kp2, inplanes=64, planes=64, stride=1, reduction=16)
    y2 = se_basic_block(y1, p_id, batch_tile=2)                # (4, 64, 16)

    jax.block_until_ready(y2)
    assert y1.shape == (N, 64, 16), y1.shape
    assert y2.shape == (N, 64, 16), y2.shape

    # Numerical check against the pure-JAX f32 reference (kernel uses bf16 MXU
    # operands, so allow a small relative tolerance).
    r1 = _reference_block(x, p_down)
    r2 = _reference_block(r1, p_id)
    for got, want in ((y1, r1), (y2, r2)):
        rel = float(jnp.linalg.norm(got - want) / (jnp.linalg.norm(want) + 1e-6))
        assert rel < 5e-2, f"relative error too large: {rel}"

    print("KERNEL_OK")
</pallas_src>

<mosaic_0001>
module attributes {stable_mosaic.version = 11 : i64} {
  func.func @_se_basic_block_kernel(%arg0: i32, %arg1: memref<2x32x32xf32, #tpu.memory_space<vmem>>, %arg2: memref<96x64xbf16, #tpu.memory_space<vmem>>, %arg3: memref<1x64xf32, #tpu.memory_space<vmem>>, %arg4: memref<192x64xbf16, #tpu.memory_space<vmem>>, %arg5: memref<1x64xf32, #tpu.memory_space<vmem>>, %arg6: memref<64x4xbf16, #tpu.memory_space<vmem>>, %arg7: memref<4x64xbf16, #tpu.memory_space<vmem>>, %arg8: memref<32x64xbf16, #tpu.memory_space<vmem>>, %arg9: memref<1x64xf32, #tpu.memory_space<vmem>>, %arg10: memref<32x64xbf16, #tpu.memory_space<vmem>>, %arg11: memref<2x16x64xf32, #tpu.memory_space<vmem>>, %arg12: memref<2x32x96xf32, #tpu.memory_space<vmem>>, %arg13: memref<2x16x192xf32, #tpu.memory_space<vmem>>) attributes {dimension_semantics = [#tpu.dimension_semantics<parallel>], iteration_bounds = array<i64: 2>, scalar_prefetch = 0 : i64, scratch_operands = 2 : i64, tpu.core_type = #tpu.core_type<tc>, window_params = [{transform_indices = @transform_0, window_bounds = array<i64: 2, 32, 32>}, {pipeline_mode = #tpu.pipeline_mode<synchronous>, transform_indices = @transform_1, window_bounds = array<i64: 96, 64>}, {pipeline_mode = #tpu.pipeline_mode<synchronous>, transform_indices = @transform_2, window_bounds = array<i64: 1, 64>}, {pipeline_mode = #tpu.pipeline_mode<synchronous>, transform_indices = @transform_3, window_bounds = array<i64: 192, 64>}, {pipeline_mode = #tpu.pipeline_mode<synchronous>, transform_indices = @transform_4, window_bounds = array<i64: 1, 64>}, {pipeline_mode = #tpu.pipeline_mode<synchronous>, transform_indices = @transform_5, window_bounds = array<i64: 64, 4>}, {pipeline_mode = #tpu.pipeline_mode<synchronous>, transform_indices = @transform_6, window_bounds = array<i64: 4, 64>}, {pipeline_mode = #tpu.pipeline_mode<synchronous>, transform_indices = @transform_7, window_bounds = array<i64: 32, 64>}, {pipeline_mode = #tpu.pipeline_mode<synchronous>, transform_indices = @transform_8, window_bounds = array<i64: 1, 64>}, {pipeline_mode = #tpu.pipeline_mode<synchronous>, transform_indices = @transform_9, window_bounds = array<i64: 32, 64>}, {transform_indices = @transform_10, window_bounds = array<i64: 2, 16, 64>}]} {
    %c0 = arith.constant 0 : index
    %c0_0 = arith.constant 0 : index
    %c0_1 = arith.constant 0 : index
    %0 = vector.load %arg1[%c0, %c0_0, %c0_1] : memref<2x32x32xf32, #tpu.memory_space<vmem>>, vector<2x32x32xf32>
    %cst = arith.constant 0.000000e+00 : f32
    %1 = vector.broadcast %cst : f32 to vector<2x1x32xf32>
    %c0_2 = arith.constant 0 : index
    %c0_3 = arith.constant 0 : index
    %c0_4 = arith.constant 0 : index
    %2 = vector.load %arg12[%c0_2, %c0_3, %c0_4] : memref<2x32x96xf32, #tpu.memory_space<vmem>>, vector<2x1x32xf32>
    tpu.vector_store %arg12[%c0_2, %c0_3, %c0_4], %1 {strides = array<i32>} : memref<2x32x96xf32, #tpu.memory_space<vmem>>, vector<2x1x32xf32>,
    %3 = vector.extract_strided_slice %0 {offsets = [0, 0, 0], sizes = [2, 31, 32], strides = [1, 1, 1]} : vector<2x32x32xf32> to vector<2x31x32xf32>
    %c0_5 = arith.constant 0 : index
    %c1 = arith.constant 1 : index
    %c0_6 = arith.constant 0 : index
    %4 = vector.load %arg12[%c0_5, %c1, %c0_6] : memref<2x32x96xf32, #tpu.memory_space<vmem>>, vector<2x31x32xf32>
    tpu.vector_store %arg12[%c0_5, %c1, %c0_6], %3 {strides = array<i32>} : memref<2x32x96xf32, #tpu.memory_space<vmem>>, vector<2x31x32xf32>,
    %c0_7 = arith.constant 0 : index
    %c0_8 = arith.constant 0 : index
    %c32 = arith.constant 32 : index
    %5 = vector.load %arg12[%c0_7, %c0_8, %c32] : memref<2x32x96xf32, #tpu.memory_space<vmem>>, vector<2x32x32xf32>
    tpu.vector_store %arg12[%c0_7, %c0_8, %c32], %0 {strides = array<i32>} : memref<2x32x96xf32, #tpu.memory_space<vmem>>, vector<2x32x32xf32>,
    %6 = vector.extract_strided_slice %0 {offsets = [0, 1, 0], sizes = [2, 31, 32], strides = [1, 1, 1]} : vector<2x32x32xf32> to vector<2x31x32xf32>
    %c0_9 = arith.constant 0 : index
    %c0_10 = arith.constant 0 : index
    %c64 = arith.constant 64 : index
    %7 = vector.load %arg12[%c0_9, %c0_10, %c64] : memref<2x32x96xf32, #tpu.memory_space<vmem>>, vector<2x31x32xf32>
    tpu.vector_store %arg12[%c0_9, %c0_10, %c64], %6 {strides = array<i32>} : memref<2x32x96xf32, #tpu.memory_space<vmem>>, vector<2x31x32xf32>,
    %c0_11 = arith.constant 0 : index
    %c31 = arith.constant 31 : index
    %c64_12 = arith.constant 64 : index
    %8 = vector.load %arg12[%c0_11, %c31, %c64_12] : memref<2x32x96xf32, #tpu.memory_space<vmem>>, vector<2x1x32xf32>
    tpu.vector_store %arg12[%c0_11, %c31, %c64_12], %1 {strides = array<i32>} : memref<2x32x96xf32, #tpu.memory_space<vmem>>, vector<2x1x32xf32>,
    %c0_13 = arith.constant 0 : index
    %c0_14 = arith.constant 0 : index
    %c0_15 = arith.constant 0 : index
    %9 = vector.load %arg12[%c0_13, %c0_14, %c0_15] : memref<2x32x96xf32, #tpu.memory_space<vmem>>, vector<2x32x96xf32>
    %10 = arith.truncf %9 : vector<2x32x96xf32> to vector<2x32x96xbf16>
    %11 = vector.shape_cast %10 : vector<2x32x96xbf16> to vector<64x96xbf16>
    %c0_16 = arith.constant 0 : index
    %c0_17 = arith.constant 0 : index
    %12 = vector.load %arg10[%c0_16, %c0_17] : memref<32x64xbf16, #tpu.memory_space<vmem>>, vector<32x64xbf16>
    %cst_18 = arith.constant dense<0.000000e+00> : vector<32x96xf32>
    %13 = tpu.matmul %12, %11, %cst_18 {dimension_numbers = #tpu.dot_dimension_numbers<[1], [0], [0], [1], [0, 0, 1, 1], [], []>} : vector<32x64xbf16>, vector<64x96xbf16>, vector<32x96xf32> -> vector<32x96xf32>
    %14 = arith.truncf %13 : vector<32x96xf32> to vector<32x96xbf16>
    %c0_19 = arith.constant 0 : index
    %c0_20 = arith.constant 0 : index
    %15 = vector.load %arg2[%c0_19, %c0_20] : memref<96x64xbf16, #tpu.memory_space<vmem>>, vector<96x64xbf16>
    %cst_21 = arith.constant dense<0.000000e+00> : vector<32x64xf32>
    %16 = tpu.matmul %14, %15, %cst_21 {dimension_numbers = #tpu.dot_dimension_numbers<[1], [0], [0], [1], [0, 0, 1, 1], [], []>} : vector<32x96xbf16>, vector<96x64xbf16>, vector<32x64xf32> -> vector<32x64xf32>
    %c0_22 = arith.constant 0 : index
    %c0_23 = arith.constant 0 : index
    %17 = vector.load %arg3[%c0_22, %c0_23] : memref<1x64xf32, #tpu.memory_space<vmem>>, vector<1x64xf32>
    %18 = vector.broadcast %17 : vector<1x64xf32> to vector<32x64xf32>
    %19 = arith.addf %16, %18 : vector<32x64xf32>
    %cst_24 = arith.constant 0.000000e+00 : f32
    %20 = vector.broadcast %cst_24 : f32 to vector<32x64xf32>
    %21 = arith.maximumf %19, %20 : vector<32x64xf32>
    %22 = vector.shape_cast %21 : vector<32x64xf32> to vector<2x16x64xf32>
    %cst_25 = arith.constant 0.000000e+00 : f32
    %23 = vector.broadcast %cst_25 : f32 to vector<2x1x64xf32>
    %c0_26 = arith.constant 0 : index
    %c0_27 = arith.constant 0 : index
    %c0_28 = arith.constant 0 : index
    %24 = vector.load %arg13[%c0_26, %c0_27, %c0_28] : memref<2x16x192xf32, #tpu.memory_space<vmem>>, vector<2x1x64xf32>
    tpu.vector_store %arg13[%c0_26, %c0_27, %c0_28], %23 {strides = array<i32>} : memref<2x16x192xf32, #tpu.memory_space<vmem>>, vector<2x1x64xf32>,
    %25 = vector.extract_strided_slice %22 {offsets = [0, 0, 0], sizes = [2, 15, 64], strides = [1, 1, 1]} : vector<2x16x64xf32> to vector<2x15x64xf32>
    %c0_29 = arith.constant 0 : index
    %c1_30 = arith.constant 1 : index
    %c0_31 = arith.constant 0 : index
    %26 = vector.load %arg13[%c0_29, %c1_30, %c0_31] : memref<2x16x192xf32, #tpu.memory_space<vmem>>, vector<2x15x64xf32>
    tpu.vector_store %arg13[%c0_29, %c1_30, %c0_31], %25 {strides = array<i32>} : memref<2x16x192xf32, #tpu.memory_space<vmem>>, vector<2x15x64xf32>,
    %c0_32 = arith.constant 0 : index
    %c0_33 = arith.constant 0 : index
    %c64_34 = arith.constant 64 : index
    %27 = vector.load %arg13[%c0_32, %c0_33, %c64_34] : memref<2x16x192xf32, #tpu.memory_space<vmem>>, vector<2x16x64xf32>
    tpu.vector_store %arg13[%c0_32, %c0_33, %c64_34], %22 {strides = array<i32>} : memref<2x16x192xf32, #tpu.memory_space<vmem>>, vector<2x16x64xf32>,
    %28 = vector.extract_strided_slice %22 {offsets = [0, 1, 0], sizes = [2, 15, 64], strides = [1, 1, 1]} : vector<2x16x64xf32> to vector<2x15x64xf32>
    %c0_35 = arith.constant 0 : index
    %c0_36 = arith.constant 0 : index
    %c128 = arith.constant 128 : index
    %29 = vector.load %arg13[%c0_35, %c0_36, %c128] : memref<2x16x192xf32, #tpu.memory_space<vmem>>, vector<2x15x64xf32>
    tpu.vector_store %arg13[%c0_35, %c0_36, %c128], %28 {strides = array<i32>} : memref<2x16x192xf32, #tpu.memory_space<vmem>>, vector<2x15x64xf32>,
    %c0_37 = arith.constant 0 : index
    %c15 = arith.constant 15 : index
    %c128_38 = arith.constant 128 : index
    %30 = vector.load %arg13[%c0_37, %c15, %c128_38] : memref<2x16x192xf32, #tpu.memory_space<vmem>>, vector<2x1x64xf32>
    tpu.vector_store %arg13[%c0_37, %c15, %c128_38], %23 {strides = array<i32>} : memref<2x16x192xf32, #tpu.memory_space<vmem>>, vector<2x1x64xf32>,
    %c0_39 = arith.constant 0 : index
    %c0_40 = arith.constant 0 : index
    %c0_41 = arith.constant 0 : index
    %31 = vector.load %arg13[%c0_39, %c0_40, %c0_41] : memref<2x16x192xf32, #tpu.memory_space<vmem>>, vector<2x16x192xf32>
    %32 = arith.truncf %31 : vector<2x16x192xf32> to vector<2x16x192xbf16>
    %33 = vector.shape_cast %32 : vector<2x16x192xbf16> to vector<32x192xbf16>
    %c0_42 = arith.constant 0 : index
    %c0_43 = arith.constant 0 : index
    %34 = vector.load %arg4[%c0_42, %c0_43] : memref<192x64xbf16, #tpu.memory_space<vmem>>, vector<192x64xbf16>
    %cst_44 = arith.constant dense<0.000000e+00> : vector<32x64xf32>
    %35 = tpu.matmul %33, %34, %cst_44 {dimension_numbers = #tpu.dot_dimension_numbers<[1], [0], [0], [1], [0, 0, 1, 1], [], []>} : vector<32x192xbf16>, vector<192x64xbf16>, vector<32x64xf32> -> vector<32x64xf32>
    %c0_45 = arith.constant 0 : index
    %c0_46 = arith.constant 0 : index
    %36 = vector.load %arg5[%c0_45, %c0_46] : memref<1x64xf32, #tpu.memory_space<vmem>>, vector<1x64xf32>
    %37 = vector.broadcast %36 : vector<1x64xf32> to vector<32x64xf32>
    %38 = arith.addf %35, %37 : vector<32x64xf32>
    %39 = vector.shape_cast %38 : vector<32x64xf32> to vector<2x16x64xf32>
    %cst_47 = arith.constant dense<0.000000e+00> : vector<2x64xf32>
    %40 = vector.multi_reduction <add>, %39, %cst_47 [1] : vector<2x16x64xf32> to vector<2x64xf32>
    %cst_48 = arith.constant 1.600000e+01 : f32
    %41 = vector.broadcast %cst_48 : f32 to vector<2x64xf32>
    %42 = arith.divf %40, %41 : vector<2x64xf32>
    %43 = arith.truncf %42 : vector<2x64xf32> to vector<2x64xbf16>
    %c0_49 = arith.constant 0 : index
    %c0_50 = arith.constant 0 : index
    %44 = vector.load %arg6[%c0_49, %c0_50] : memref<64x4xbf16, #tpu.memory_space<vmem>>, vector<64x4xbf16>
    %cst_51 = arith.constant dense<0.000000e+00> : vector<2x4xf32>
    %45 = tpu.matmul %43, %44, %cst_51 {dimension_numbers = #tpu.dot_dimension_numbers<[1], [0], [0], [1], [0, 0, 1, 1], [], []>} : vector<2x64xbf16>, vector<64x4xbf16>, vector<2x4xf32> -> vector<2x4xf32>
    %cst_52 = arith.constant 0.000000e+00 : f32
    %46 = vector.broadcast %cst_52 : f32 to vector<2x4xf32>
    %47 = arith.maximumf %45, %46 : vector<2x4xf32>
    %48 = arith.truncf %47 : vector<2x4xf32> to vector<2x4xbf16>
    %c0_53 = arith.constant 0 : index
    %c0_54 = arith.constant 0 : index
    %49 = vector.load %arg7[%c0_53, %c0_54] : memref<4x64xbf16, #tpu.memory_space<vmem>>, vector<4x64xbf16>
    %cst_55 = arith.constant dense<0.000000e+00> : vector<2x64xf32>
    %50 = tpu.matmul %48, %49, %cst_55 {dimension_numbers = #tpu.dot_dimension_numbers<[1], [0], [0], [1], [0, 0, 1, 1], [], []>} : vector<2x4xbf16>, vector<4x64xbf16>, vector<2x64xf32> -> vector<2x64xf32>
    %51 = arith.negf %50 : vector<2x64xf32>
    %52 = math.exp %51 : vector<2x64xf32>
    %cst_56 = arith.constant 1.000000e+00 : f32
    %53 = vector.broadcast %cst_56 : f32 to vector<2x64xf32>
    %54 = arith.addf %53, %52 : vector<2x64xf32>
    %55 = arith.divf %53, %54 : vector<2x64xf32>
    %56 = vector.shape_cast %55 : vector<2x64xf32> to vector<2x1x64xf32>
    %57 = vector.broadcast %56 : vector<2x1x64xf32> to vector<2x16x64xf32>
    %58 = arith.mulf %39, %57 : vector<2x16x64xf32>
    %59 = arith.truncf %0 : vector<2x32x32xf32> to vector<2x32x32xbf16>
    %60 = vector.shape_cast %59 : vector<2x32x32xbf16> to vector<64x32xbf16>
    %cst_57 = arith.constant dense<0.000000e+00> : vector<32x32xf32>
    %61 = tpu.matmul %12, %60, %cst_57 {dimension_numbers = #tpu.dot_dimension_numbers<[1], [0], [0], [1], [0, 0, 1, 1], [], []>} : vector<32x64xbf16>, vector<64x32xbf16>, vector<32x32xf32> -> vector<32x32xf32>
    %62 = arith.truncf %61 : vector<32x32xf32> to vector<32x32xbf16>
    %c0_58 = arith.constant 0 : index
    %c0_59 = arith.constant 0 : index
    %63 = vector.load %arg8[%c0_58, %c0_59] : memref<32x64xbf16, #tpu.memory_space<vmem>>, vector<32x64xbf16>
    %cst_60 = arith.constant dense<0.000000e+00> : vector<32x64xf32>
    %64 = tpu.matmul %62, %63, %cst_60 {dimension_numbers = #tpu.dot_dimension_numbers<[1], [0], [0], [1], [0, 0, 1, 1], [], []>} : vector<32x32xbf16>, vector<32x64xbf16>, vector<32x64xf32> -> vector<32x64xf32>
    %c0_61 = arith.constant 0 : index
    %c0_62 = arith.constant 0 : index
    %65 = vector.load %arg9[%c0_61, %c0_62] : memref<1x64xf32, #tpu.memory_space<vmem>>, vector<1x64xf32>
    %66 = vector.broadcast %65 : vector<1x64xf32> to vector<32x64xf32>
    %67 = arith.addf %64, %66 : vector<32x64xf32>
    %68 = vector.shape_cast %67 : vector<32x64xf32> to vector<2x16x64xf32>
    %69 = arith.addf %58, %68 : vector<2x16x64xf32>
    %cst_63 = arith.constant 0.000000e+00 : f32
    %70 = vector.broadcast %cst_63 : f32 to vector<2x16x64xf32>
    %71 = arith.maximumf %69, %70 : vector<2x16x64xf32>
    %c0_64 = arith.constant 0 : index
    %c0_65 = arith.constant 0 : index
    %c0_66 = arith.constant 0 : index
    %72 = vector.load %arg11[%c0_64, %c0_65, %c0_66] : memref<2x16x64xf32, #tpu.memory_space<vmem>>, vector<2x16x64xf32>
    tpu.vector_store %arg11[%c0_64, %c0_65, %c0_66], %71 {strides = array<i32>} : memref<2x16x64xf32, #tpu.memory_space<vmem>>, vector<2x16x64xf32>,
    return
  }
  func.func @transform_0(%arg0: i32) -> (i32, i32, i32) {
    %c0_i32 = arith.constant 0 : i32
    %c0_i32_0 = arith.constant 0 : i32
    %c0_i32_1 = arith.constant 0 : i32
    return %arg0, %c0_i32, %c0_i32_0 : i32, i32, i32
  }
  func.func @transform_1(%arg0: i32) -> (i32, i32) {
    %c0_i32 = arith.constant 0 : i32
    %c0_i32_0 = arith.constant 0 : i32
    %c0_i32_1 = arith.constant 0 : i32
    return %c0_i32, %c0_i32_0 : i32, i32
  }
  func.func @transform_2(%arg0: i32) -> (i32, i32) {
    %c0_i32 = arith.constant 0 : i32
    %c0_i32_0 = arith.constant 0 : i32
    %c0_i32_1 = arith.constant 0 : i32
    return %c0_i32, %c0_i32_0 : i32, i32
  }
  func.func @transform_3(%arg0: i32) -> (i32, i32) {
    %c0_i32 = arith.constant 0 : i32
    %c0_i32_0 = arith.constant 0 : i32
    %c0_i32_1 = arith.constant 0 : i32
    return %c0_i32, %c0_i32_0 : i32, i32
  }
  func.func @transform_4(%arg0: i32) -> (i32, i32) {
    %c0_i32 = arith.constant 0 : i32
    %c0_i32_0 = arith.constant 0 : i32
    %c0_i32_1 = arith.constant 0 : i32
    return %c0_i32, %c0_i32_0 : i32, i32
  }
  func.func @transform_5(%arg0: i32) -> (i32, i32) {
    %c0_i32 = arith.constant 0 : i32
    %c0_i32_0 = arith.constant 0 : i32
    %c0_i32_1 = arith.constant 0 : i32
    return %c0_i32, %c0_i32_0 : i32, i32
  }
  func.func @transform_6(%arg0: i32) -> (i32, i32) {
    %c0_i32 = arith.constant 0 : i32
    %c0_i32_0 = arith.constant 0 : i32
    %c0_i32_1 = arith.constant 0 : i32
    return %c0_i32, %c0_i32_0 : i32, i32
  }
  func.func @transform_7(%arg0: i32) -> (i32, i32) {
    %c0_i32 = arith.constant 0 : i32
    %c0_i32_0 = arith.constant 0 : i32
    %c0_i32_1 = arith.constant 0 : i32
    return %c0_i32, %c0_i32_0 : i32, i32
  }
  func.func @transform_8(%arg0: i32) -> (i32, i32) {
    %c0_i32 = arith.constant 0 : i32
    %c0_i32_0 = arith.constant 0 : i32
    %c0_i32_1 = arith.constant 0 : i32
    return %c0_i32, %c0_i32_0 : i32, i32
  }
  func.func @transform_9(%arg0: i32) -> (i32, i32) {
    %c0_i32 = arith.constant 0 : i32
    %c0_i32_0 = arith.constant 0 : i32
    %c0_i32_1 = arith.constant 0 : i32
    return %c0_i32, %c0_i32_0 : i32, i32
  }
  func.func @transform_10(%arg0: i32) -> (i32, i32, i32) {
    %c0_i32 = arith.constant 0 : i32
    %c0_i32_0 = arith.constant 0 : i32
    %c0_i32_1 = arith.constant 0 : i32
    return %arg0, %c0_i32, %c0_i32_0 : i32, i32, i32
  }
}

</mosaic_0001>

<llo_original>
// kernel: tpu_custom_call.1
$region0: #{tpu_custom_call.1}
  #allocation0 [shape = 'u32[]', space=smem, size = 0x4, offset = 0x4, fixed_abs, tag = 'smem constant byte address 0x4 - core index']
  #allocation1 [shape = 'u32[72,128]{1,0:T(1,128)}', space=vmem, size = 0x9000, scoped, tag = 'internal scratch']
  #allocation2 [shape = 'f32[2,32,96]{2,1,0:T(8,128)}', space=vmem, size = 0x8000, scoped, tag = 'scratch operand']
  #allocation3 [shape = 'f32[2,16,192]{2,1,0:T(8,128)}', space=vmem, size = 0x8000, scoped, tag = 'scratch operand']
  %s0 = inlined_call_operand.vmem [shape: f32[4,32,32], index: 0, kind: input, shape index: {}]
  %s1 = inlined_call_operand.vmem [shape: bf16[96,64], index: 1, kind: input, shape index: {}]
  %s2 = inlined_call_operand.vmem [shape: f32[1,64], index: 2, kind: input, shape index: {}]
  %s3 = inlined_call_operand.vmem [shape: bf16[192,64], index: 3, kind: input, shape index: {}]
  %s4 = inlined_call_operand.vmem [shape: f32[1,64], index: 4, kind: input, shape index: {}]
  %s5 = inlined_call_operand.vmem [shape: bf16[64,4], index: 5, kind: input, shape index: {}]
  %s6 = inlined_call_operand.vmem [shape: bf16[4,64], index: 6, kind: input, shape index: {}]
  %s7 = inlined_call_operand.vmem [shape: bf16[32,64], index: 7, kind: input, shape index: {}]
  %s8 = inlined_call_operand.vmem [shape: f32[1,64], index: 8, kind: input, shape index: {}]
  %s9 = inlined_call_operand.vmem [shape: bf16[32,64], index: 9, kind: input, shape index: {}]
  %s10 = inlined_call_operand.hbm [shape: f32[4,16,64], index: 10, kind: output, shape index: {}]
  %s11 = sld [smem:[#allocation0]]
  $region73: #{tpu_custom_call.1} parent=0
    _
  %s13 = ssub.s32 1, %s11
  %s14 = scalar_select 0, %s13, %s11
  $region1: #{tpu_custom_call.1} parent=0
    #allocation4 [shape = 'u8[32768]{0}', space=vmem, size = 0x8000, scoped, tag = 'output window, operand 0']
    #allocation5 [shape = 's32[2]{0}', space=sflag, size = 0x8, scoped, tag = 'scoped memory for tpu_custom_call.1']
    %15 = vsyncpa [#allocation5], 0
    %s16 = scalar_lea.sflag [#allocation5], 1
    %17 = vsyncpa %s16, 0
    loop: start=0, step=1, limit=4
    $region2: #{tpu_custom_call.1} parent=1 // loop_pre_header
      _
    $region3: #{tpu_custom_call.1} parent=1 // loop_header
      %s19 = sphi 0, %s23
      %p20 = scmp.ge.s32.totalorder %s19, 4
      %s29 = sphi 0, %s31
      %s32 = sphi 0, %s29
      %s33 = sphi 0, %s32
      %s49 = sphi 0, %s33
      %s53 = sphi 0, %s53
      %s55 = sphi 0, %s53
      %s56 = sphi 0, %s55
      %s70 = sphi 0, %s56
      %s74 = sphi 0, %s74
      %s76 = sphi 0, %s74
      %s77 = sphi 0, %s76
      %s91 = sphi 0, %s77
      %s95 = sphi 0, %s95
      %s97 = sphi 0, %s95
      %s98 = sphi 0, %s97
      %s112 = sphi 0, %s98
      %s116 = sphi 0, %s116
      %s118 = sphi 0, %s116
      %s119 = sphi 0, %s118
      %s133 = sphi 0, %s119
      %s137 = sphi 0, %s137
      %s139 = sphi 0, %s137
      %s140 = sphi 0, %s139
      %s154 = sphi 0, %s140
      %s158 = sphi 0, %s158
      %s160 = sphi 0, %s158
      %s161 = sphi 0, %s160
      %s175 = sphi 0, %s161
      %s179 = sphi 0, %s179
      %s181 = sphi 0, %s179
      %s182 = sphi 0, %s181
      %s196 = sphi 0, %s182
      %s200 = sphi 0, %s200
      %s202 = sphi 0, %s200
      %s203 = sphi 0, %s202
      %s217 = sphi 0, %s203
      %s221 = sphi 0, %s221
      %s223 = sphi 0, %s221
      %s224 = sphi 0, %s223
      %s238 = sphi 0, %s224
      %s244 = sphi 0, %s246
      %s247 = sphi 0, %s244
      %s248 = sphi 0, %s247
      %s264 = sphi 0, %s248
    $region4: #{tpu_custom_call.1} parent=1 // loop_header_branch
      %22 = sbr.rel (%p20) target = $region8
    $region5: #{tpu_custom_call.1} parent=1 // loop_body
      %s24 = ssub.s32 %s19, 1
      %s25 = ssub.s32 %s19, 2
      %s26 = sadd.s32 %s19, 1
      %s27 = ssub.s32 %s19, %s26
      %p28 = scmp.eq.s32.totalorder %s27, 0
      %s30 = sadd.s32 %s29, 1
      %s31 = scalar_select %p28, %s29, %s30
      %p34 = pneg %p28
      %p35 = scmp.eq.s32.totalorder %s19, 1
      %p36 = por %p34, %p35
      %p37 = scmp.ne.s32.totalorder %s29, %s32
      %p38 = scmp.eq.s32.totalorder %s19, 0
      %p39 = por %p37, %p38
      %p40 = scmp.ne.s32.totalorder %s29, %s32
      %p41 = scmp.eq.s32.totalorder %s24, 1
      %p42 = por %p40, %p41
      %p43 = scmp.ne.s32.totalorder %s32, %s33
      %p44 = scmp.eq.s32.totalorder %s24, 0
      %p45 = por %p43, %p44
      %p46 = scmp.ne.s32.totalorder %s32, %s33
      %p47 = scmp.eq.s32.totalorder %s25, 1
      %p48 = por %p46, %p47
      %p50 = scmp.ne.s32.totalorder %s33, %s49
      %p51 = scmp.eq.s32.totalorder %s25, 0
      %p52 = por %p50, %p51
      %s54 = sadd.s32 %s53, 1
      %p57 = scmp.eq.s32.totalorder %s19, 1
      %p58 = scmp.ne.s32.totalorder %s53, %s55
      %p59 = scmp.eq.s32.totalorder %s19, 0
      %p60 = por %p58, %p59
      %p61 = scmp.ne.s32.totalorder %s53, %s55
      %p62 = scmp.eq.s32.totalorder %s24, 1
      %p63 = por %p61, %p62
      %p64 = scmp.ne.s32.totalorder %s55, %s56
      %p65 = scmp.eq.s32.totalorder %s24, 0
      %p66 = por %p64, %p65
      %p67 = scmp.ne.s32.totalorder %s55, %s56
      %p68 = scmp.eq.s32.totalorder %s25, 1
      %p69 = por %p67, %p68
      %p71 = scmp.ne.s32.totalorder %s56, %s70
      %p72 = scmp.eq.s32.totalorder %s25, 0
      %p73 = por %p71, %p72
      %s75 = sadd.s32 %s74, 1
      %p78 = scmp.eq.s32.totalorder %s19, 1
      %p79 = scmp.ne.s32.totalorder %s74, %s76
      %p80 = scmp.eq.s32.totalorder %s19, 0
      %p81 = por %p79, %p80
      %p82 = scmp.ne.s32.totalorder %s74, %s76
      %p83 = scmp.eq.s32.totalorder %s24, 1
      %p84 = por %p82, %p83
      %p85 = scmp.ne.s32.totalorder %s76, %s77
      %p86 = scmp.eq.s32.totalorder %s24, 0
      %p87 = por %p85, %p86
      %p88 = scmp.ne.s32.totalorder %s76, %s77
      %p89 = scmp.eq.s32.totalorder %s25, 1
      %p90 = por %p88, %p89
      %p92 = scmp.ne.s32.totalorder %s77, %s91
      %p93 = scmp.eq.s32.totalorder %s25, 0
      %p94 = por %p92, %p93
      %s96 = sadd.s32 %s95, 1
      %p99 = scmp.eq.s32.totalorder %s19, 1
      %p100 = scmp.ne.s32.totalorder %s95, %s97
      %p101 = scmp.eq.s32.totalorder %s19, 0
      %p102 = por %p100, %p101
      %p103 = scmp.ne.s32.totalorder %s95, %s97
      %p104 = scmp.eq.s32.totalorder %s24, 1
      %p105 = por %p103, %p104
      %p106 = scmp.ne.s32.totalorder %s97, %s98
      %p107 = scmp.eq.s32.totalorder %s24, 0
      %p108 = por %p106, %p107
      %p109 = scmp.ne.s32.totalorder %s97, %s98
      %p110 = scmp.eq.s32.totalorder %s25, 1
      %p111 = por %p109, %p110
      %p113 = scmp.ne.s32.totalorder %s98, %s112
      %p114 = scmp.eq.s32.totalorder %s25, 0
      %p115 = por %p113, %p114
      %s117 = sadd.s32 %s116, 1
      %p120 = scmp.eq.s32.totalorder %s19, 1
      %p121 = scmp.ne.s32.totalorder %s116, %s118
      %p122 = scmp.eq.s32.totalorder %s19, 0
      %p123 = por %p121, %p122
      %p124 = scmp.ne.s32.totalorder %s116, %s118
      %p125 = scmp.eq.s32.totalorder %s24, 1
      %p126 = por %p124, %p125
      %p127 = scmp.ne.s32.totalorder %s118, %s119
      %p128 = scmp.eq.s32.totalorder %s24, 0
      %p129 = por %p127, %p128
      %p130 = scmp.ne.s32.totalorder %s118, %s119
      %p131 = scmp.eq.s32.totalorder %s25, 1
      %p132 = por %p130, %p131
      %p134 = scmp.ne.s32.totalorder %s119, %s133
      %p135 = scmp.eq.s32.totalorder %s25, 0
      %p136 = por %p134, %p135
      %s138 = sadd.s32 %s137, 1
      %p141 = scmp.eq.s32.totalorder %s19, 1
      %p142 = scmp.ne.s32.totalorder %s137, %s139
      %p143 = scmp.eq.s32.totalorder %s19, 0
      %p144 = por %p142, %p143
      %p145 = scmp.ne.s32.totalorder %s137, %s139
      %p146 = scmp.eq.s32.totalorder %s24, 1
      %p147 = por %p145, %p146
      %p148 = scmp.ne.s32.totalorder %s139, %s140
      %p149 = scmp.eq.s32.totalorder %s24, 0
      %p150 = por %p148, %p149
      %p151 = scmp.ne.s32.totalorder %s139, %s140
      %p152 = scmp.eq.s32.totalorder %s25, 1
      %p153 = por %p151, %p152
      %p155 = scmp.ne.s32.totalorder %s140, %s154
      %p156 = scmp.eq.s32.totalorder %s25, 0
      %p157 = por %p155, %p156
      %s159 = sadd.s32 %s158, 1
      %p162 = scmp.eq.s32.totalorder %s19, 1
      %p163 = scmp.ne.s32.totalorder %s158, %s160
      %p164 = scmp.eq.s32.totalorder %s19, 0
      %p165 = por %p163, %p164
      %p166 = scmp.ne.s32.totalorder %s158, %s160
      %p167 = scmp.eq.s32.totalorder %s24, 1
      %p168 = por %p166, %p167
      %p169 = scmp.ne.s32.totalorder %s160, %s161
      %p170 = scmp.eq.s32.totalorder %s24, 0
      %p171 = por %p169, %p170
      %p172 = scmp.ne.s32.totalorder %s160, %s161
      %p173 = scmp.eq.s32.totalorder %s25, 1
      %p174 = por %p172, %p173
      %p176 = scmp.ne.s32.totalorder %s161, %s175
      %p177 = scmp.eq.s32.totalorder %s25, 0
      %p178 = por %p176, %p177
      %s180 = sadd.s32 %s179, 1
      %p183 = scmp.eq.s32.totalorder %s19, 1
      %p184 = scmp.ne.s32.totalorder %s179, %s181
      %p185 = scmp.eq.s32.totalorder %s19, 0
      %p186 = por %p184, %p185
      %p187 = scmp.ne.s32.totalorder %s179, %s181
      %p188 = scmp.eq.s32.totalorder %s24, 1
      %p189 = por %p187, %p188
      %p190 = scmp.ne.s32.totalorder %s181, %s182
      %p191 = scmp.eq.s32.totalorder %s24, 0
      %p192 = por %p190, %p191
      %p193 = scmp.ne.s32.totalorder %s181, %s182
      %p194 = scmp.eq.s32.totalorder %s25, 1
      %p195 = por %p193, %p194
      %p197 = scmp.ne.s32.totalorder %s182, %s196
      %p198 = scmp.eq.s32.totalorder %s25, 0
      %p199 = por %p197, %p198
      %s201 = sadd.s32 %s200, 1
      %p204 = scmp.eq.s32.totalorder %s19, 1
      %p205 = scmp.ne.s32.totalorder %s200, %s202
      %p206 = scmp.eq.s32.totalorder %s19, 0
      %p207 = por %p205, %p206
      %p208 = scmp.ne.s32.totalorder %s200, %s202
      %p209 = scmp.eq.s32.totalorder %s24, 1
      %p210 = por %p208, %p209
      %p211 = scmp.ne.s32.totalorder %s202, %s203
      %p212 = scmp.eq.s32.totalorder %s24, 0
      %p213 = por %p211, %p212
      %p214 = scmp.ne.s32.totalorder %s202, %s203
      %p215 = scmp.eq.s32.totalorder %s25, 1
      %p216 = por %p214, %p215
      %p218 = scmp.ne.s32.totalorder %s203, %s217
      %p219 = scmp.eq.s32.totalorder %s25, 0
      %p220 = por %p218, %p219
      %s222 = sadd.s32 %s221, 1
      %p225 = scmp.eq.s32.totalorder %s19, 1
      %p226 = scmp.ne.s32.totalorder %s221, %s223
      %p227 = scmp.eq.s32.totalorder %s19, 0
      %p228 = por %p226, %p227
      %p229 = scmp.ne.s32.totalorder %s221, %s223
      %p230 = scmp.eq.s32.totalorder %s24, 1
      %p231 = por %p229, %p230
      %p232 = scmp.ne.s32.totalorder %s223, %s224
      %p233 = scmp.eq.s32.totalorder %s24, 0
      %p234 = por %p232, %p233
      %p235 = scmp.ne.s32.totalorder %s223, %s224
      %p236 = scmp.eq.s32.totalorder %s25, 1
      %p237 = por %p235, %p236
      %p239 = scmp.ne.s32.totalorder %s224, %s238
      %p240 = scmp.eq.s32.totalorder %s25, 0
      %p241 = por %p239, %p240
      %s242 = ssub.s32 %s19, %s26
      %p243 = scmp.eq.s32.totalorder %s242, 0
      %s245 = sadd.s32 %s244, 1
      %s246 = scalar_select %p243, %s244, %s245
      %p249 = pneg %p243
      %p250 = scmp.eq.s32.totalorder %s19, 1
      %p251 = por %p249, %p250
      %p252 = scmp.ne.s32.totalorder %s244, %s247
      %p253 = scmp.eq.s32.totalorder %s19, 0
      %p254 = por %p252, %p253
      %p255 = scmp.ne.s32.totalorder %s244, %s247
      %p256 = scmp.eq.s32.totalorder %s24, 1
      %p257 = por %p255, %p256
      %p258 = scmp.ne.s32.totalorder %s247, %s248
      %p259 = scmp.eq.s32.totalorder %s24, 0
      %p260 = por %p258, %p259
      %p261 = scmp.ne.s32.totalorder %s247, %s248
      %p262 = scmp.eq.s32.totalorder %s25, 1
      %p263 = por %p261, %p262
      %p265 = scmp.ne.s32.totalorder %s248, %s264
      %p266 = scmp.eq.s32.totalorder %s25, 0
      %p267 = por %p265, %p266
      %p268 = scmp.le.s32.totalorder 1, %s19
      %p269 = scmp.lt.s32.totalorder %s19, 3
      %p270 = pnand %p268, %p269
      %p271 = pneg %p270
      // Predicated region
      $region9: #{tpu_custom_call.1} parent=5 // pred_check
        _
      $region10: #{tpu_custom_call.1} parent=5 // pred_check_branch
        %273 = sbr.rel (%p270) target = $region12
      $region11: #{tpu_custom_call.1} parent=5 // pred_region
        %s274 = ssub.s32 %s19, 1
        // Predicated region
        $region13: #{tpu_custom_call.1} parent=11 // pred_check
          %p275 = pneg %p66
        $region14: #{tpu_custom_call.1} parent=11 // pred_check_branch
          %277 = sbr.rel (%p275) target = $region16
        $region15: #{tpu_custom_call.1} parent=11 // pred_region
          _
        $region16: #{tpu_custom_call.1} parent=11 // pred_fallthru
          _
        // Predicated region
        $region17: #{tpu_custom_call.1} parent=11 // pred_check
          %p278 = pneg %p87
        $region18: #{tpu_custom_call.1} parent=11 // pred_check_branch
          %280 = sbr.rel (%p278) target = $region20
        $region19: #{tpu_custom_call.1} parent=11 // pred_region
          _
        $region20: #{tpu_custom_call.1} parent=11 // pred_fallthru
          _
        // Predicated region
        $region21: #{tpu_custom_call.1} parent=11 // pred_check
          %p281 = pneg %p108
        $region22: #{tpu_custom_call.1} parent=11 // pred_check_branch
          %283 = sbr.rel (%p281) target = $region24
        $region23: #{tpu_custom_call.1} parent=11 // pred_region
          _
        $region24: #{tpu_custom_call.1} parent=11 // pred_fallthru
          _
        // Predicated region
        $region25: #{tpu_custom_call.1} parent=11 // pred_check
          %p284 = pneg %p129
        $region26: #{tpu_custom_call.1} parent=11 // pred_check_branch
          %286 = sbr.rel (%p284) target = $region28
        $region27: #{tpu_custom_call.1} parent=11 // pred_region
          _
        $region28: #{tpu_custom_call.1} parent=11 // pred_fallthru
          _
        // Predicated region
        $region29: #{tpu_custom_call.1} parent=11 // pred_check
          %p287 = pneg %p150
        $region30: #{tpu_custom_call.1} parent=11 // pred_check_branch
          %289 = sbr.rel (%p287) target = $region32
        $region31: #{tpu_custom_call.1} parent=11 // pred_region
          _
        $region32: #{tpu_custom_call.1} parent=11 // pred_fallthru
          _
        // Predicated region
        $region33: #{tpu_custom_call.1} parent=11 // pred_check
          %p290 = pneg %p171
        $region34: #{tpu_custom_call.1} parent=11 // pred_check_branch
          %292 = sbr.rel (%p290) target = $region36
        $region35: #{tpu_custom_call.1} parent=11 // pred_region
          _
        $region36: #{tpu_custom_call.1} parent=11 // pred_fallthru
          _
        // Predicated region
        $region37: #{tpu_custom_call.1} parent=11 // pred_check
          %p293 = pneg %p192
        $region38: #{tpu_custom_call.1} parent=11 // pred_check_branch
          %295 = sbr.rel (%p293) target = $region40
        $region39: #{tpu_custom_call.1} parent=11 // pred_region
          _
        $region40: #{tpu_custom_call.1} parent=11 // pred_fallthru
          _
        // Predicated region
        $region41: #{tpu_custom_call.1} parent=11 // pred_check
          %p296 = pneg %p213
        $region42: #{tpu_custom_call.1} parent=11 // pred_check_branch
          %298 = sbr.rel (%p296) target = $region44
        $region43: #{tpu_custom_call.1} parent=11 // pred_region
          _
        $region44: #{tpu_custom_call.1} parent=11 // pred_fallthru
          _
        // Predicated region
        $region45: #{tpu_custom_call.1} parent=11 // pred_check
          %p299 = pneg %p234
        $region46: #{tpu_custom_call.1} parent=11 // pred_check_branch
          %301 = sbr.rel (%p299) target = $region48
        $region47: #{tpu_custom_call.1} parent=11 // pred_region
          _
        $region48: #{tpu_custom_call.1} parent=11 // pred_fallthru
          _
      $region12: #{tpu_custom_call.1} parent=5 // pred_fallthru
        _
      %p302 = scmp.lt.s32.totalorder %s19, 2
      // Predicated region
      $region49: #{tpu_custom_call.1} parent=5 // pred_check
        %p303 = pneg %p302
      $region50: #{tpu_custom_call.1} parent=5 // pred_check_branch
        %305 = sbr.rel (%p303) target = $region52
      $region51: #{tpu_custom_call.1} parent=5 // pred_region
        // Predicated region
        $region53: #{tpu_custom_call.1} parent=51 // pred_check
          %p306 = pneg %p39
        $region54: #{tpu_custom_call.1} parent=51 // pred_check_branch
          %308 = sbr.rel (%p306) target = $region56
        $region55: #{tpu_custom_call.1} parent=51 // pred_region
          %s309 = smul.u32 2, %s19
          %p310 = scmp.lt.s32.totalorder %s309, 3
          %s311 = scalar_select %p310, %s309, 3
          %s312 = smul.addr %s311, 4
          %s313 = smul.addr %s312, 8
          %s314 = scalar_lea.vmem %s0, %s313
          %s315 = smul.u32 2, %s19
        $region56: #{tpu_custom_call.1} parent=51 // pred_fallthru
          _
      $region52: #{tpu_custom_call.1} parent=5 // pred_fallthru
        _
      %p316 = scmp.le.s32.totalorder 1, %s19
      %p317 = scmp.lt.s32.totalorder %s19, 3
      %p318 = pnand %p316, %p317
      %p319 = pneg %p318
      // Predicated region
      $region57: #{tpu_custom_call.1} parent=5 // pred_check
        _
      $region58: #{tpu_custom_call.1} parent=5 // pred_check_branch
        %321 = sbr.rel (%p318) target = $region60
      $region59: #{tpu_custom_call.1} parent=5 // pred_region
        %s322 = ssub.s32 %s19, 1
        %s323 = smul.u32 2, %s24
        %p324 = scmp.lt.s32.totalorder %s323, 3
        %s325 = scalar_select %p324, %s323, 3
        %s326 = smul.addr %s325, 4
        %s327 = smul.addr %s326, 8
        %s328 = scalar_lea.vmem %s0, %s327
        %p329 = pneg %p45
        %p330 = pneg %p42
        %p331 = pneg %p66
        %p332 = pneg %p63
        %p333 = pneg %p87
        %p334 = pneg %p84
        %p335 = pneg %p108
        %p336 = pneg %p105
        %p337 = pneg %p129
        %p338 = pneg %p126
        %p339 = pneg %p150
        %p340 = pneg %p147
        %p341 = pneg %p171
        %p342 = pneg %p168
        %p343 = pneg %p192
        %p344 = pneg %p189
        %p345 = pneg %p213
        %p346 = pneg %p210
        %p347 = pneg %p234
        %p348 = pneg %p231
        %p349 = pneg %p260
        %p350 = pneg %p257
        %s351 = sand.u32 %s247, 1
        %s352 = scalar_lea.sflag [#allocation5], %s351
        %s353 = sand.u32 %s247, 1
        %s354 = smul.addr %s353, 32
        %s355 = scalar_lea.vmem [#allocation4], %s354
        %s356 = smul.u32 2, %s24
        %p357 = scmp.lt.s32.totalorder %s356, 3
        %s358 = scalar_select %p357, %s356, 3
        %s359 = smul.addr %s358, 4
        %s360 = smul.addr %s359, 8
        %s361 = scalar_lea.vmem %s0, %s360
        %s362 = smul.u32 2, %s24
        %s363 = smul.u32 2, %s24
        %v365 = vld [vmem:[%s361] sm:$0xff]
        %v366 = vld [vmem:[%s361 + $0x8] sm:$0xff]
        %v367 = vld [vmem:[%s361 + $0x10] sm:$0xff]
        %v368 = vld [vmem:[%s361 + $0x18] sm:$0xff]
        %v369 = vld [vmem:[%s361 + $0x20] sm:$0xff]
        %v370 = vld [vmem:[%s361 + $0x28] sm:$0xff]
        %v371 = vld [vmem:[%s361 + $0x30] sm:$0xff]
        %v372 = vld [vmem:[%s361 + $0x38] sm:$0xff]
        %vm373 = vcmask 253952
        %374 = vst.msk [vmem:[#allocation2] sm:$0x1] %vm373, 0.0
        %375 = vst.msk [vmem:[#allocation2 + $0x20] sm:$0x1] %vm373, 0.0
        %vm376 = vcmask 261120
        %377 = vst.msk [vmem:[#allocation2 + $0x1] sm:$0xff] %vm376, %v365
        %378 = vst.msk [vmem:[#allocation2 + $0x9] sm:$0xff] %vm376, %v366
        %379 = vst.msk [vmem:[#allocation2 + $0x11] sm:$0xff] %vm376, %v367
        %vm380 = vcmask 260096
        %381 = vst.msk [vmem:[#allocation2 + $0x19] sm:$0x7f] %vm380, %v368
        %382 = vst.msk [vmem:[#allocation2 + $0x21] sm:$0xff] %vm376, %v369
        %383 = vst.msk [vmem:[#allocation2 + $0x29] sm:$0xff] %vm376, %v370
        %384 = vst.msk [vmem:[#allocation2 + $0x31] sm:$0xff] %vm376, %v371
        %385 = vst.msk [vmem:[#allocation2 + $0x39] sm:$0x7f] %vm380, %v372
        %394 = vrot.lane.b32.xlu0 %v365, 32
        %v395 = vpop.permute.xlu0 %394
        %396 = vrot.lane.b32.xlu0 %v366, 32
        %v397 = vpop.permute.xlu0 %396
        %398 = vrot.lane.b32.xlu0 %v367, 32
        %v399 = vpop.permute.xlu0 %398
        %400 = vrot.lane.b32.xlu0 %v368, 32
        %v401 = vpop.permute.xlu0 %400
        %402 = vrot.lane.b32.xlu0 %v369, 32
        %v403 = vpop.permute.xlu0 %402
        %404 = vrot.lane.b32.xlu0 %v370, 32
        %v405 = vpop.permute.xlu0 %404
        %406 = vrot.lane.b32.xlu0 %v371, 32
        %v407 = vpop.permute.xlu0 %406
        %408 = vrot.lane.b32.xlu0 %v372, 32
        %v409 = vpop.permute.xlu0 %408
        %vm418 = vcmask 523520
        %419 = vst.msk [vmem:[#allocation2] sm:$0xff] %vm418, %v395
        %420 = vst.msk [vmem:[#allocation2 + $0x8] sm:$0xff] %vm418, %v397
        %421 = vst.msk [vmem:[#allocation2 + $0x10] sm:$0xff] %vm418, %v399
        %422 = vst.msk [vmem:[#allocation2 + $0x18] sm:$0xff] %vm418, %v401
        %423 = vst.msk [vmem:[#allocation2 + $0x20] sm:$0xff] %vm418, %v403
        %424 = vst.msk [vmem:[#allocation2 + $0x28] sm:$0xff] %vm418, %v405
        %425 = vst.msk [vmem:[#allocation2 + $0x30] sm:$0xff] %vm418, %v407
        %426 = vst.msk [vmem:[#allocation2 + $0x38] sm:$0xff] %vm418, %v409
        %427 = vrot.lane.b32.xlu0 %v365, 64
        %v428 = vpop.permute.xlu0 %427
        %429 = vrot.lane.b32.xlu0 %v366, 64
        %v430 = vpop.permute.xlu0 %429
        %431 = vrot.lane.b32.xlu0 %v367, 64
        %v432 = vpop.permute.xlu0 %431
        %433 = vrot.lane.b32.xlu0 %v368, 64
        %v434 = vpop.permute.xlu0 %433
        %435 = vrot.lane.b32.xlu0 %v369, 64
        %v436 = vpop.permute.xlu0 %435
        %437 = vrot.lane.b32.xlu0 %v370, 64
        %v438 = vpop.permute.xlu0 %437
        %439 = vrot.lane.b32.xlu0 %v371, 64
        %v440 = vpop.permute.xlu0 %439
        %441 = vrot.lane.b32.xlu0 %v372, 64
        %v442 = vpop.permute.xlu0 %441
        %vm451 = vcmask 785921
        %452 = vst.msk [vmem:[#allocation2 - $0x1] sm:$0xfe] %vm451, %v428
        %vm453 = vcmask 785920
        %454 = vst.msk [vmem:[#allocation2 + $0x7] sm:$0xff] %vm453, %v430
        %455 = vst.msk [vmem:[#allocation2 + $0xf] sm:$0xff] %vm453, %v432
        %456 = vst.msk [vmem:[#allocation2 + $0x17] sm:$0xff] %vm453, %v434
        %457 = vst.msk [vmem:[#allocation2 + $0x1f] sm:$0xfe] %vm451, %v436
        %458 = vst.msk [vmem:[#allocation2 + $0x27] sm:$0xff] %vm453, %v438
        %459 = vst.msk [vmem:[#allocation2 + $0x2f] sm:$0xff] %vm453, %v440
        %460 = vst.msk [vmem:[#allocation2 + $0x37] sm:$0xff] %vm453, %v442
        %vm461 = vcmask 778752
        %462 = vst.msk [vmem:[#allocation2 + $0x1f] sm:$0x1] %vm461, 0.0
        %463 = vst.msk [vmem:[#allocation2 + $0x3f] sm:$0x1] %vm461, 0.0
        %v464 = vld [vmem:[#allocation2] sm:$0xff]
        %v465 = vld [vmem:[#allocation2 + $0x8] sm:$0xff]
        %v466 = vld [vmem:[#allocation2 + $0x10] sm:$0xff]
        %v467 = vld [vmem:[#allocation2 + $0x18] sm:$0xff]
        %v468 = vld [vmem:[#allocation2 + $0x20] sm:$0xff]
        %v469 = vld [vmem:[#allocation2 + $0x28] sm:$0xff]
        %v470 = vld [vmem:[#allocation2 + $0x30] sm:$0xff]
        %v471 = vld [vmem:[#allocation2 + $0x38] sm:$0xff]
        %v472 = vpack.c.bf16 %v464, %v464
        %v473 = vpack.c.bf16 %v465, %v465
        %v474 = vpack.c.bf16 %v466, %v466
        %v475 = vpack.c.bf16 %v467, %v467
        %v476 = vpack.c.bf16 %v468, %v468
        %v477 = vpack.c.bf16 %v469, %v469
        %v478 = vpack.c.bf16 %v470, %v470
        %v479 = vpack.c.bf16 %v471, %v471
        %v480 = vld [vmem:[%s9] sm:$0xf]
        %v481 = vld [vmem:[%s9 + $0x4] sm:$0xf]
        %v482 = vld [vmem:[%s9 + $0x8] sm:$0xf]
        %v483 = vld [vmem:[%s9 + $0xc] sm:$0xf]
        %v488 = vunpack.c.l.b16 %v480
        %v489 = vunpack.c.l.b16 %v481
        %v490 = vunpack.c.l.b16 %v482
        %v491 = vunpack.c.l.b16 %v483
        %v492 = vpack.c.b16 %v489, %v488
        %v493 = vpack.c.b16 %v491, %v490
        %v502 = vunpack.c.l.b16 %v472
        %v503 = vunpack.c.l.b16 %v473
        %v504 = vunpack.c.l.b16 %v474
        %v505 = vunpack.c.l.b16 %v475
        %v506 = vunpack.c.l.b16 %v476
        %v507 = vunpack.c.l.b16 %v477
        %v508 = vunpack.c.l.b16 %v478
        %v509 = vunpack.c.l.b16 %v479
        %v510 = vpack.c.b16 %v503, %v502
        %v511 = vpack.c.b16 %v505, %v504
        %v512 = vpack.c.b16 %v507, %v506
        %v513 = vpack.c.b16 %v509, %v508
        %vm518 = vcmask 523264
        %v520 = vsel %vm518, %v492, 0
        %v523 = vsel %vm518, %v493, 0
        %525 = vmatpush.bf16.msra.mxu0 0
        %526 = vmatpush.bf16.msra.mxu0 0
        %527 = vmatpush.bf16.msra.mxu0 0
        %528 = vmatpush.bf16.msra.mxu0 0
        %529 = vmatpush.bf16.msra.mxu0 %v513
        %530 = vmatpush.bf16.msra.mxu0 %v512
        %531 = vmatpush.bf16.msra.mxu0 %v511
        %532 = vmatpush.bf16.msra.mxu0 %v510
        %533 = vmatmul.bf16.gmra.mxu0 %v520
        %v534 = vpop.f32.mrf.mxu0
        %v535 = vadd.f32 0.0, %v534
        %v536 = vpop.f32.mrf.mxu0
        %v537 = vadd.f32 0.0, %v536
        %538 = vmatmul.bf16.gmra.mxu0 %v523
        %v539 = vpop.f32.mrf.mxu0
        %v540 = vadd.f32 0.0, %v539
        %v541 = vpop.f32.mrf.mxu0
        %v542 = vadd.f32 0.0, %v541
        %543 = vdwg.mxu0
        %v544 = vpack.c.bf16 %v537, %v535
        %v545 = vpack.c.bf16 %v542, %v540
        %v546 = vld [vmem:[%s1] sm:$0xf]
        %v547 = vld [vmem:[%s1 + $0x4] sm:$0xf]
        %v548 = vld [vmem:[%s1 + $0x8] sm:$0xf]
        %v549 = vld [vmem:[%s1 + $0xc] sm:$0xf]
        %v550 = vld [vmem:[%s1 + $0x10] sm:$0xf]
        %v551 = vld [vmem:[%s1 + $0x14] sm:$0xf]
        %v552 = vld [vmem:[%s1 + $0x18] sm:$0xf]
        %v553 = vld [vmem:[%s1 + $0x1c] sm:$0xf]
        %v554 = vld [vmem:[%s1 + $0x20] sm:$0xf]
        %v555 = vld [vmem:[%s1 + $0x24] sm:$0xf]
        %v556 = vld [vmem:[%s1 + $0x28] sm:$0xf]
        %v557 = vld [vmem:[%s1 + $0x2c] sm:$0xf]
        %v558 = vld [vmem:[%s2] sm:$0x1]
        %v560 = vperm.slane %v558, 0
        %v574 = vunpack.c.l.b16 %v546
        %v575 = vunpack.c.l.b16 %v547
        %v576 = vunpack.c.l.b16 %v548
        %v577 = vunpack.c.l.b16 %v549
        %v578 = vunpack.c.l.b16 %v550
        %v579 = vunpack.c.l.b16 %v551
        %v580 = vunpack.c.l.b16 %v552
        %v581 = vunpack.c.l.b16 %v553
        %v582 = vunpack.c.l.b16 %v554
        %v583 = vunpack.c.l.b16 %v555
        %v584 = vunpack.c.l.b16 %v556
        %v585 = vunpack.c.l.b16 %v557
        %v586 = vpack.c.b16 %v575, %v574
        %v587 = vpack.c.b16 %v577, %v576
        %v588 = vpack.c.b16 %v579, %v578
        %v589 = vpack.c.b16 %v581, %v580
        %v590 = vpack.c.b16 %v583, %v582
        %v591 = vpack.c.b16 %v585, %v584
        %vm598 = vcmask 785408
        %v600 = vsel %vm598, %v544, 0
        %v603 = vsel %vm598, %v545, 0
        %605 = vmatpush.bf16.msra.mxu0 0
        %606 = vmatpush.bf16.msra.mxu0 0
        %607 = vmatpush.bf16.msra.mxu0 %v591
        %608 = vmatpush.bf16.msra.mxu0 %v590
        %609 = vmatpush.bf16.msra.mxu0 %v589
        %610 = vmatpush.bf16.msra.mxu0 %v588
        %611 = vmatpush.bf16.msra.mxu0 %v587
        %612 = vmatpush.bf16.msra.mxu0 %v586
        %613 = vmatmul.bf16.gmra.mxu0 %v600
        %v614 = vpop.f32.mrf.mxu0
        %v615 = vadd.f32 %v560, %v614
        %v616 = vpop.f32.mrf.mxu0
        %v617 = vadd.f32 %v560, %v616
        %618 = vmatmul.bf16.gmra.mxu0 %v603
        %v619 = vpop.f32.mrf.mxu0
        %v620 = vadd.f32 %v560, %v619
        %v621 = vpop.f32.mrf.mxu0
        %v622 = vadd.f32 %v560, %v621
        %623 = vdwg.mxu0
        %v624 = vmax.f32 %v615, 0.0
        %v625 = vmax.f32 %v617, 0.0
        %v626 = vmax.f32 %v620, 0.0
        %v627 = vmax.f32 %v622, 0.0
        %vm628 = vcmask 516096
        %629 = vst.msk [vmem:[#allocation3] sm:$0x1] %vm628, 0.0
        %630 = vst.msk [vmem:[#allocation3 + $0x20] sm:$0x1] %vm628, 0.0
        %vm635 = vcmask 1040384
        %v636 = vrot.slane %v624, 7
        %v637 = vrot.slane %v625, 7
        %v638 = vsel %vm635, %v636, %v637
        %v639 = vrot.slane %v626, 7
        %v640 = vrot.slane %v627, 7
        %v641 = vsel %vm635, %v639, %v640
        %vm646 = vcmask 523265
        %647 = vst.msk [vmem:[#allocation3] sm:$0xfe] %vm646, %v636
        %648 = vst.msk [vmem:[#allocation3 + $0x10] sm:$0xff] %vm518, %v638
        %649 = vst.msk [vmem:[#allocation3 + $0x20] sm:$0xfe] %vm646, %v639
        %650 = vst.msk [vmem:[#allocation3 + $0x30] sm:$0xff] %vm518, %v641
        %651 = vrot.lane.b32.xlu0 %v624, 64
        %v652 = vpop.permute.xlu0 %651
        %653 = vrot.lane.b32.xlu0 %v625, 64
        %v654 = vpop.permute.xlu0 %653
        %655 = vrot.lane.b32.xlu0 %v626, 64
        %v656 = vpop.permute.xlu0 %655
        %657 = vrot.lane.b32.xlu0 %v627, 64
        %v658 = vpop.permute.xlu0 %657
        %vm663 = vcmask 1048064
        %664 = vst.msk [vmem:[#allocation3] sm:$0xff] %vm663, %v652
        %665 = vst.msk [vmem:[#allocation3 + $0x10] sm:$0xff] %vm663, %v654
        %666 = vst.msk [vmem:[#allocation3 + $0x20] sm:$0xff] %vm663, %v656
        %667 = vst.msk [vmem:[#allocation3 + $0x30] sm:$0xff] %vm663, %v658
        %vm668 = vcmask 1046528
        %v669 = vrot.slane %v624, 1
        %v670 = vrot.slane %v625, 1
        %v671 = vsel %vm668, %v669, %v670
        %v672 = vrot.slane %v626, 1
        %v673 = vrot.slane %v627, 1
        %v674 = vsel %vm668, %v672, %v673
        %679 = vst.msk [vmem:[#allocation3 + $0x8] sm:$0xff] %vm518, %v671
        %vm680 = vcmask 522240
        %681 = vst.msk [vmem:[#allocation3 + $0x18] sm:$0x7f] %vm680, %v670
        %682 = vst.msk [vmem:[#allocation3 + $0x28] sm:$0xff] %vm518, %v674
        %683 = vst.msk [vmem:[#allocation3 + $0x38] sm:$0x7f] %vm680, %v673
        %684 = vst.msk [vmem:[#allocation3 + $0x1f] sm:$0x1] %vm628, 0.0
        %685 = vst.msk [vmem:[#allocation3 + $0x3f] sm:$0x1] %vm628, 0.0
        %v686 = vld [vmem:[#allocation3] sm:$0xff]
        %v687 = vld [vmem:[#allocation3 + $0x8] sm:$0xff]
        %v688 = vld [vmem:[#allocation3 + $0x10] sm:$0xff]
        %v689 = vld [vmem:[#allocation3 + $0x18] sm:$0xff]
        %v690 = vld [vmem:[#allocation3 + $0x20] sm:$0xff]
        %v691 = vld [vmem:[#allocation3 + $0x28] sm:$0xff]
        %v692 = vld [vmem:[#allocation3 + $0x30] sm:$0xff]
        %v693 = vld [vmem:[#allocation3 + $0x38] sm:$0xff]
        %v694 = vpack.c.bf16 %v687, %v686
        %v695 = vpack.c.bf16 %v689, %v688
        %v696 = vpack.c.bf16 %v691, %v690
        %v697 = vpack.c.bf16 %v693, %v692
        %v698 = vld [vmem:[%s3] sm:$0xf]
        %v699 = vld [vmem:[%s3 + $0x4] sm:$0xf]
        %v700 = vld [vmem:[%s3 + $0x8] sm:$0xf]
        %v701 = vld [vmem:[%s3 + $0xc] sm:$0xf]
        %v702 = vld [vmem:[%s3 + $0x10] sm:$0xf]
        %v703 = vld [vmem:[%s3 + $0x14] sm:$0xf]
        %v704 = vld [vmem:[%s3 + $0x18] sm:$0xf]
        %v705 = vld [vmem:[%s3 + $0x1c] sm:$0xf]
        %v706 = vld [vmem:[%s3 + $0x20] sm:$0xf]
        %v707 = vld [vmem:[%s3 + $0x24] sm:$0xf]
        %v708 = vld [vmem:[%s3 + $0x28] sm:$0xf]
        %v709 = vld [vmem:[%s3 + $0x2c] sm:$0xf]
        %v710 = vld [vmem:[%s3 + $0x30] sm:$0xf]
        %v711 = vld [vmem:[%s3 + $0x34] sm:$0xf]
        %v712 = vld [vmem:[%s3 + $0x38] sm:$0xf]
        %v713 = vld [vmem:[%s3 + $0x3c] sm:$0xf]
        %v714 = vld [vmem:[%s3 + $0x40] sm:$0xf]
        %v715 = vld [vmem:[%s3 + $0x44] sm:$0xf]
        %v716 = vld [vmem:[%s3 + $0x48] sm:$0xf]
        %v717 = vld [vmem:[%s3 + $0x4c] sm:$0xf]
        %v718 = vld [vmem:[%s3 + $0x50] sm:$0xf]
        %v719 = vld [vmem:[%s3 + $0x54] sm:$0xf]
        %v720 = vld [vmem:[%s3 + $0x58] sm:$0xf]
        %v721 = vld [vmem:[%s3 + $0x5c] sm:$0xf]
        %v722 = vld [vmem:[%s4] sm:$0x1]
        %v724 = vperm.slane %v722, 0
        %v730 = vunpack.c.l.b16 %v694
        %v731 = vunpack.c.h.b16 %v694
        %v732 = vunpack.c.l.b16 %v695
        %v733 = vunpack.c.h.b16 %v695
        %v734 = vunpack.c.l.b16 %v696
        %v735 = vunpack.c.h.b16 %v696
        %v736 = vunpack.c.l.b16 %v697
        %v737 = vunpack.c.h.b16 %v697
        %v738 = vpack.c.b16 %v732, %v730
        %v739 = vpack.c.b16 %v733, %v731
        %v740 = vpack.c.b16 %v736, %v734
        %v741 = vpack.c.b16 %v737, %v735
        %v768 = vunpack.c.l.b16 %v698
        %v769 = vunpack.c.l.b16 %v699
        %v770 = vunpack.c.l.b16 %v700
        %v771 = vunpack.c.l.b16 %v701
        %v772 = vunpack.c.l.b16 %v702
        %v773 = vunpack.c.l.b16 %v703
        %v774 = vunpack.c.l.b16 %v704
        %v775 = vunpack.c.l.b16 %v705
        %v776 = vunpack.c.l.b16 %v706
        %v777 = vunpack.c.l.b16 %v707
        %v778 = vunpack.c.l.b16 %v708
        %v779 = vunpack.c.l.b16 %v709
        %v780 = vunpack.c.l.b16 %v710
        %v781 = vunpack.c.l.b16 %v711
        %v782 = vunpack.c.l.b16 %v712
        %v783 = vunpack.c.l.b16 %v713
        %v784 = vunpack.c.l.b16 %v714
        %v785 = vunpack.c.l.b16 %v715
        %v786 = vunpack.c.l.b16 %v716
        %v787 = vunpack.c.l.b16 %v717
        %v788 = vunpack.c.l.b16 %v718
        %v789 = vunpack.c.l.b16 %v719
        %v790 = vunpack.c.l.b16 %v720
        %v791 = vunpack.c.l.b16 %v721
        %v792 = vpack.c.b16 %v769, %v768
        %v793 = vpack.c.b16 %v771, %v770
        %v794 = vpack.c.b16 %v773, %v772
        %v795 = vpack.c.b16 %v775, %v774
        %v796 = vpack.c.b16 %v777, %v776
        %v797 = vpack.c.b16 %v779, %v778
        %v798 = vpack.c.b16 %v781, %v780
        %v799 = vpack.c.b16 %v783, %v782
        %v800 = vpack.c.b16 %v785, %v784
        %v801 = vpack.c.b16 %v787, %v786
        %v802 = vpack.c.b16 %v789, %v788
        %v803 = vpack.c.b16 %v791, %v790
        %v817 = vsel %vm518, %v739, 0
        %v820 = vsel %vm518, %v741, 0
        %822 = vmatpush.bf16.msra.mxu0 %v799
        %823 = vmatpush.bf16.msra.mxu0 %v798
        %824 = vmatpush.bf16.msra.mxu0 %v797
        %825 = vmatpush.bf16.msra.mxu0 %v796
        %826 = vmatpush.bf16.msra.mxu0 %v795
        %827 = vmatpush.bf16.msra.mxu0 %v794
        %828 = vmatpush.bf16.msra.mxu0 %v793
        %829 = vmatpush.bf16.msra.mxu0 %v792
        %830 = vmatmul.bf16.gmra.mxu0 %v738
        %v831 = vpop.f32.mrf.mxu0
        %v832 = vadd.f32 %v724, %v831
        %v833 = vpop.f32.mrf.mxu0
        %v834 = vadd.f32 %v724, %v833
        %835 = vmatmul.bf16.gmra.mxu0 %v740
        %v836 = vpop.f32.mrf.mxu0
        %v837 = vadd.f32 %v724, %v836
        %v838 = vpop.f32.mrf.mxu0
        %v839 = vadd.f32 %v724, %v838
        %840 = vdwg.mxu0
        %841 = vmatpush.bf16.msra.mxu0 0
        %842 = vmatpush.bf16.msra.mxu0 0
        %843 = vmatpush.bf16.msra.mxu0 0
        %844 = vmatpush.bf16.msra.mxu0 0
        %845 = vmatpush.bf16.msra.mxu0 %v803
        %846 = vmatpush.bf16.msra.mxu0 %v802
        %847 = vmatpush.bf16.msra.mxu0 %v801
        %848 = vmatpush.bf16.msra.mxu0 %v800
        %849 = vmatmul.bf16.gmra.mxu0 %v817
        %v850 = vpop.f32.mrf.mxu0
        %v851 = vadd.f32 %v832, %v850
        %v852 = vpop.f32.mrf.mxu0
        %v853 = vadd.f32 %v834, %v852
        %854 = vmatmul.bf16.gmra.mxu0 %v820
        %v855 = vpop.f32.mrf.mxu0
        %v856 = vadd.f32 %v837, %v855
        %v857 = vpop.f32.mrf.mxu0
        %v858 = vadd.f32 %v839, %v857
        %859 = vdwg.mxu0
        %v860 = vsel %vm518, %v851, 0.0
        %v861 = vsel %vm518, %v853, 0.0
        %v862 = vadd.f32 %v860, %v861
        %v863 = vrot.slane %v862, 4
        %v864 = vadd.f32 %v862, %v863
        %v865 = vrot.slane %v864, 2
        %v866 = vadd.f32 %v864, %v865
        %v867 = vrot.slane %v866, 1
        %v868 = vadd.f32 %v866, %v867
        %v869 = vsel %vm518, %v856, 0.0
        %v870 = vsel %vm518, %v858, 0.0
        %v871 = vadd.f32 %v869, %v870
        %v872 = vrot.slane %v871, 4
        %v873 = vadd.f32 %v871, %v872
        %v874 = vrot.slane %v873, 2
        %v875 = vadd.f32 %v873, %v874
        %v876 = vrot.slane %v875, 1
        %v877 = vadd.f32 %v875, %v876
        %v878 = vrcp.pop 16.0
        %v879 = vmul.f32 16.0, %v878
        %v880 = vsub.f32 1.0, %v879
        %v881 = vmul.f32 %v878, %v880
        %v882 = vadd.f32 %v878, %v881
        %vm883 = vweird.f32 %v878
        %v884 = vsel %vm883, %v878, %v882
        %v885 = vmul.f32 %v868, %v884
        %v886 = vmul.f32 %v877, %v884
        %v887 = vpack.c.bf16 %v885, %v885
        %v888 = vpack.c.bf16 %v886, %v886
        %v889 = vld [vmem:[%s5] sm:$0xf]
        %v890 = vld [vmem:[%s5 + $0x4] sm:$0xf]
        %v891 = vld [vmem:[%s5 + $0x8] sm:$0xf]
        %v892 = vld [vmem:[%s5 + $0xc] sm:$0xf]
        %v893 = vld [vmem:[%s5 + $0x10] sm:$0xf]
        %v894 = vld [vmem:[%s5 + $0x14] sm:$0xf]
        %v895 = vld [vmem:[%s5 + $0x18] sm:$0xf]
        %v896 = vld [vmem:[%s5 + $0x1c] sm:$0xf]
        %v899 = vunpack.c.l.b16 %v887
        %v900 = vunpack.c.l.b16 %v888
        %vm901 = vcmask 1041409
        %v902 = vsel %vm901, %v900, %v899
        %v903 = vpack.c.b16 %v902, %v902
        %v912 = vunpack.c.l.b16 %v889
        %v913 = vunpack.c.l.b16 %v890
        %v914 = vunpack.c.l.b16 %v891
        %v915 = vunpack.c.l.b16 %v892
        %v916 = vunpack.c.l.b16 %v893
        %v917 = vunpack.c.l.b16 %v894
        %v918 = vunpack.c.l.b16 %v895
        %v919 = vunpack.c.l.b16 %v896
        %v920 = vpack.c.b16 %v913, %v912
        %v921 = vpack.c.b16 %v915, %v914
        %v922 = vpack.c.b16 %v917, %v916
        %v923 = vpack.c.b16 %v919, %v918
        %v929 = vsel %vm518, %v903, 0
        %931 = vmatpush.bf16.msra.mxu0 0
        %932 = vmatpush.bf16.msra.mxu0 0
        %933 = vmatpush.bf16.msra.mxu0 0
        %934 = vmatpush.bf16.msra.mxu0 0
        %935 = vmatpush.bf16.msra.mxu0 %v923
        %936 = vmatpush.bf16.msra.mxu0 %v922
        %937 = vmatpush.bf16.msra.mxu0 %v921
        %938 = vmatpush.bf16.msra.mxu0 %v920
        %939 = vmatmul.bf16.gmra.mxu0 %v929
        %v940 = vpop.f32.mrf.mxu0
        %v941 = vadd.f32 0.0, %v940
        %v942 = vpop.f32.mrf.mxu0
        %943 = vdwg.mxu0
        %v944 = vmax.f32 %v941, 0.0
        %v945 = vpack.c.bf16 %v944, %v944
        %v946 = vld [vmem:[%s6] sm:$0x3]
        %vm947 = vcmask 31744
        %v949 = vsel %vm947, %v945, 0
        %vm951 = vcmask 1041408
        %v953 = vsel %vm951, %v946, 0
        %955 = vmatpush.bf16.msra.mxu0 0
        %956 = vmatpush.bf16.msra.mxu0 0
        %957 = vmatpush.bf16.msra.mxu0 0
        %958 = vmatpush.bf16.msra.mxu0 0
        %959 = vmatpush.bf16.msra.mxu0 0
        %960 = vmatpush.bf16.msra.mxu0 0
        %961 = vmatpush.bf16.msra.mxu0 0
        %962 = vmatpush.bf16.msra.mxu0 %v953
        %963 = vmatmul.bf16.gmra.mxu0 %v949
        %v964 = vpop.f32.mrf.mxu0
        %v965 = vadd.f32 0.0, %v964
        %v966 = vpop.f32.mrf.mxu0
        %967 = vdwg.mxu0
        %v968 = vxor.u32 %v965, 2147483648
        %v969 = vmul.f32 %v968, 1.442695
        %v970 = vpow.pop %v969
        %v971 = vadd.f32 %v970, 1.0
        %v972 = vrcp.pop %v971
        %v973 = vmul.f32 %v971, %v972
        %v974 = vsub.f32 1.0, %v973
        %v975 = vmul.f32 %v972, %v974
        %v976 = vadd.f32 %v972, %v975
        %vm977 = vweird.f32 %v971
        %vm978 = vweird.f32 %v972
        %vm979 = vmor %vm977, %vm978
        %v980 = vsel %vm979, %v972, %v976
        %v981 = vand.u32 2147483647, %v971
        %vm982 = vcmp.eq.f32.partialorder %v981, 8.507059e+37
        %v983 = vand.u32 %v971, 2147483648
        %v984 = vor.u32 1.1754944e-38, %v983
        %v985 = vsel %vm982, %v984, %v980
        %v986 = vmul.f32 1.0, %v985
        %v988 = vrot.slane %v986, 1
        %v989 = vperm.slane %v986, 0
        %v990 = vperm.slane %v988, 0
        %v993 = vmul.f32 %v851, %v989
        %v994 = vmul.f32 %v853, %v989
        %v995 = vmul.f32 %v856, %v990
        %v996 = vmul.f32 %v858, %v990
        %v997 = vpack.c.bf16 %v365, %v365
        %v998 = vpack.c.bf16 %v366, %v366
        %v999 = vpack.c.bf16 %v367, %v367
        %v1000 = vpack.c.bf16 %v368, %v368
        %v1001 = vpack.c.bf16 %v369, %v369
        %v1002 = vpack.c.bf16 %v370, %v370
        %v1003 = vpack.c.bf16 %v371, %v371
        %v1004 = vpack.c.bf16 %v372, %v372
        %v1013 = vunpack.c.l.b16 %v997
        %v1014 = vunpack.c.l.b16 %v998
        %v1015 = vunpack.c.l.b16 %v999
        %v1016 = vunpack.c.l.b16 %v1000
        %v1017 = vunpack.c.l.b16 %v1001
        %v1018 = vunpack.c.l.b16 %v1002
        %v1019 = vunpack.c.l.b16 %v1003
        %v1020 = vunpack.c.l.b16 %v1004
        %v1021 = vpack.c.b16 %v1014, %v1013
        %v1022 = vpack.c.b16 %v1016, %v1015
        %v1023 = vpack.c.b16 %v1018, %v1017
        %v1024 = vpack.c.b16 %v1020, %v1019
        %1029 = vmatpush.bf16.msra.mxu0 0
        %1030 = vmatpush.bf16.msra.mxu0 0
        %1031 = vmatpush.bf16.msra.mxu0 0
        %1032 = vmatpush.bf16.msra.mxu0 0
        %1033 = vmatpush.bf16.msra.mxu0 %v1024
        %1034 = vmatpush.bf16.msra.mxu0 %v1023
        %1035 = vmatpush.bf16.msra.mxu0 %v1022
        %1036 = vmatpush.bf16.msra.mxu0 %v1021
        %1037 = vmatmul.bf16.gmra.mxu0 %v520
        %v1038 = vpop.f32.mrf.mxu0
        %v1039 = vadd.f32 0.0, %v1038
        %v1040 = vpop.f32.mrf.mxu0
        %v1041 = vadd.f32 0.0, %v1040
        %1042 = vmatmul.bf16.gmra.mxu0 %v523
        %v1043 = vpop.f32.mrf.mxu0
        %v1044 = vadd.f32 0.0, %v1043
        %v1045 = vpop.f32.mrf.mxu0
        %v1046 = vadd.f32 0.0, %v1045
        %1047 = vdwg.mxu0
        %v1048 = vpack.c.bf16 %v1041, %v1039
        %v1049 = vpack.c.bf16 %v1046, %v1044
        %v1050 = vld [vmem:[%s7] sm:$0xf]
        %v1051 = vld [vmem:[%s7 + $0x4] sm:$0xf]
        %v1052 = vld [vmem:[%s7 + $0x8] sm:$0xf]
        %v1053 = vld [vmem:[%s7 + $0xc] sm:$0xf]
        %v1054 = vld [vmem:[%s8] sm:$0x1]
        %v1056 = vperm.slane %v1054, 0
        %v1062 = vunpack.c.l.b16 %v1050
        %v1063 = vunpack.c.l.b16 %v1051
        %v1064 = vunpack.c.l.b16 %v1052
        %v1065 = vunpack.c.l.b16 %v1053
        %v1066 = vpack.c.b16 %v1063, %v1062
        %v1067 = vpack.c.b16 %v1065, %v1064
        %v1071 = vsel %vm376, %v1048, 0
        %v1074 = vsel %vm376, %v1049, 0
        %1076 = vmatpush.bf16.msra.mxu0 0
        %1077 = vmatpush.bf16.msra.mxu0 0
        %1078 = vmatpush.bf16.msra.mxu0 0
        %1079 = vmatpush.bf16.msra.mxu0 0
        %1080 = vmatpush.bf16.msra.mxu0 0
        %1081 = vmatpush.bf16.msra.mxu0 0
        %1082 = vmatpush.bf16.msra.mxu0 %v1067
        %1083 = vmatpush.bf16.msra.mxu0 %v1066
        %1084 = vmatmul.bf16.gmra.mxu0 %v1071
        %v1085 = vpop.f32.mrf.mxu0
        %v1086 = vadd.f32 %v1056, %v1085
        %v1087 = vpop.f32.mrf.mxu0
        %v1088 = vadd.f32 %v1056, %v1087
        %1089 = vmatmul.bf16.gmra.mxu0 %v1074
        %v1090 = vpop.f32.mrf.mxu0
        %v1091 = vadd.f32 %v1056, %v1090
        %v1092 = vpop.f32.mrf.mxu0
        %v1093 = vadd.f32 %v1056, %v1092
        %1094 = vdwg.mxu0
        %v1095 = vadd.f32 %v993, %v1086
        %v1096 = vadd.f32 %v994, %v1088
        %v1097 = vadd.f32 %v995, %v1091
        %v1098 = vadd.f32 %v996, %v1093
        %v1099 = vmax.f32 %v1095, 0.0
        %v1100 = vmax.f32 %v1096, 0.0
        %v1101 = vmax.f32 %v1097, 0.0
        %v1102 = vmax.f32 %v1098, 0.0
        %1103 = vst.msk [vmem:[%s355] sm:$0xff] %vm518, %v1099
        %1104 = vst.msk [vmem:[%s355 + $0x8] sm:$0xff] %vm518, %v1100
        %1105 = vst.msk [vmem:[%s355 + $0x10] sm:$0xff] %vm518, %v1101
        %1106 = vst.msk [vmem:[%s355 + $0x18] sm:$0xff] %vm518, %v1102
        %s1107 = sand.u32 %s247, 1
        %s1108 = scalar_lea.sflag [#allocation5], %s1107
        %s1109 = sand.u32 %s247, 1
        %s1110 = smul.addr %s1109, 32
        %s1111 = scalar_lea.vmem [#allocation4], %s1110
        // Predicated region
        $region61: #{tpu_custom_call.1} parent=59 // pred_check
          %p1112 = pneg %p257
        $region62: #{tpu_custom_call.1} parent=59 // pred_check_branch
          %1114 = sbr.rel (%p1112) target = $region64
        $region63: #{tpu_custom_call.1} parent=59 // pred_region
          %s1115 = smul.u32 2, %s24
          %1117 = vsyncadd %s1108, 0
          %s1118 = smul.addr %s1115, 2
          %s1119 = smul.addr %s1118, 8
          %s1120 = scalar_lea.hbm %s10, %s1119
          %s1121 = sshll.u32 %s1111, 4
          %s1122 = int_to_ptr.vmem [resolvable:$true] %s1121
          %s1123 = sshll.u32 %s1120, 4
          %s1124 = int_to_ptr.hbm [resolvable:$true] %s1123
          %1129 = dma.vmem_to_hbm [thread:$0]  %s1122, 512, %s1124, %s1108, 128, 128, 8
        $region64: #{tpu_custom_call.1} parent=59 // pred_fallthru
          _
      $region60: #{tpu_custom_call.1} parent=5 // pred_fallthru
        _
      %p1130 = scmp.le.s32.totalorder 2, %s19
      // Predicated region
      $region65: #{tpu_custom_call.1} parent=5 // pred_check
        %p1131 = pneg %p1130
      $region66: #{tpu_custom_call.1} parent=5 // pred_check_branch
        %1133 = sbr.rel (%p1131) target = $region68
      $region67: #{tpu_custom_call.1} parent=5 // pred_region
        %s1134 = ssub.s32 %s19, 2
        // Predicated region
        $region69: #{tpu_custom_call.1} parent=67 // pred_check
          %p1135 = pneg %p263
        $region70: #{tpu_custom_call.1} parent=67 // pred_check_branch
          %1137 = sbr.rel (%p1135) target = $region72
        $region71: #{tpu_custom_call.1} parent=67 // pred_region
          %s1138 = sand.u32 %s248, 1
          %s1139 = scalar_lea.sflag [#allocation5], %s1138
          %s1140 = sand.u32 %s248, 1
          %s1141 = smul.addr %s1140, 32
          %s1142 = scalar_lea.vmem [#allocation4], %s1141
          %1144 = dma.done %s1139, 512
        $region72: #{tpu_custom_call.1} parent=67 // pred_fallthru
          _
      $region68: #{tpu_custom_call.1} parent=5 // pred_fallthru
        _
    $region6: #{tpu_custom_call.1} parent=1 // loop_footer
      %s23 = sadd.s32 1, %s19
    $region7: #{tpu_custom_call.1} parent=1 // loop_footer_branch
      %18 = sbr.rel target = $region3
    $region8: #{tpu_custom_call.1} parent=1 // loop_exit
      _
    %1145 = vsyncpa [#allocation5], 1
    %s1146 = scalar_lea.sflag [#allocation5], 1
    %1147 = vsyncpa %s1146, 1

</llo_original>
